<compile_context>
chip_gen: v5e
topology: v5e:2x2
jax: 0.10.0
libtpu: 0.0.40
codegen_flags: <defaults>
</compile_context>

<pallas_src>
import functools

import jax
import jax.numpy as jnp
from jax.experimental import pallas as pl
from jax.experimental.pallas import tpu as pltpu

LANES = 128
SUBLANES = 8


def linear_kernel(x_ref, w_ref, b_ref, o_ref, *, in_features):
    # x_ref: (TB, in_features)     activations tile (moves along batch)
    # w_ref: (in_features, OUT_P)  pre-transposed, lane-padded weights (VMEM resident)
    # b_ref: (1, OUT_P)            lane-padded bias (VMEM resident)
    # o_ref: (TB, OUT_P)           lane-dense output tile
    x = x_ref[...]
    w = w_ref[...]

    # Hoisted bias broadcast: exactly once per grid step, initializes the accumulator.
    acc = jnp.broadcast_to(b_ref[...], o_ref.shape).astype(jnp.float32)

    # K is tiny (4): unrolled VPU broadcast-FMAs instead of an MXU matmul.
    for k in range(in_features):
        acc = acc + x[:, k:k + 1].astype(jnp.float32) * w[k:k + 1, :].astype(jnp.float32)

    o_ref[...] = acc.astype(o_ref.dtype)


@functools.partial(jax.jit, static_argnames=("max_tile_b",))
def softmax_classifier_forward(x, w, b, *, max_tile_b=1024):
    """y = x @ w.T + b, matching nn.Linear(in_f, out_f).forward."""
    B, in_f = x.shape
    out_f = w.shape[0]

    # Lane-dense padding of the output dimension (3 -> 128).
    out_p = max(LANES, pl.cdiv(out_f, LANES) * LANES)
    w_t = jnp.zeros((in_f, out_p), x.dtype).at[:, :out_f].set(w.T)
    b_p = jnp.zeros((1, out_p), x.dtype).at[:, :out_f].set(b.reshape(1, out_f))

    # Batch tiling: sublane-aligned (8), big tiles to amortize per-step overhead.
    tb = min(max_tile_b, pl.cdiv(B, SUBLANES) * SUBLANES)
    b_pad = pl.cdiv(B, tb) * tb
    x_p = x if b_pad == B else jnp.zeros((b_pad, in_f), x.dtype).at[:B, :].set(x)

    grid = (b_pad // tb,)

    out = pl.pallas_call(
        functools.partial(linear_kernel, in_features=in_f),
        out_shape=jax.ShapeDtypeStruct((b_pad, out_p), x.dtype),
        grid_spec=pltpu.PrefetchScalarGridSpec(
            num_scalar_prefetch=0,
            grid=grid,
            in_specs=[
                pl.BlockSpec((tb, in_f), lambda i: (i, 0)),      # x tile moves with batch
                pl.BlockSpec((in_f, out_p), lambda i: (0, 0)),   # W stays VMEM-resident
                pl.BlockSpec((1, out_p), lambda i: (0, 0)),      # b stays VMEM-resident
            ],
            out_specs=pl.BlockSpec((tb, out_p), lambda i: (i, 0)),
        ),
        compiler_params=pltpu.CompilerParams(
            dimension_semantics=("parallel",),
        ),
    )(x_p, w_t, b_p)

    # Strip batch and lane padding (fused into the same jit program).
    return out[:B, :out_f]


if __name__ == "__main__":
    key = jax.random.PRNGKey(0)
    kx, kw, kb = jax.random.split(key, 3)

    B, IN_F, OUT_F = 8, 4, 3

    # Deterministic parameter init (mimics nn.Linear uniform(-1/sqrt(in), 1/sqrt(in)))
    bound = 1.0 / jnp.sqrt(jnp.float32(IN_F))
    w = jax.random.uniform(kw, (OUT_F, IN_F), jnp.float32, -bound, bound)
    b = jax.random.uniform(kb, (OUT_F,), jnp.float32, -bound, bound)

    x = jax.random.normal(kx, (B, IN_F), jnp.float32)

    y = softmax_classifier_forward(x, w, b)
    jax.block_until_ready(y)

    # Correctness check against plain-JAX reference (same math as nn.Linear)
    y_ref = x @ w.T + b
    assert y.shape == (B, OUT_F)
    assert jnp.allclose(y, y_ref, atol=1e-5, rtol=1e-5)

    print("KERNEL_OK")
</pallas_src>

<mosaic_0001>
module attributes {stable_mosaic.version = 11 : i64} {
  func.func @linear_kernel(%arg0: i32, %arg1: memref<8x4xf32, #tpu.memory_space<vmem>>, %arg2: memref<4x128xf32, #tpu.memory_space<vmem>>, %arg3: memref<1x128xf32, #tpu.memory_space<vmem>>, %arg4: memref<8x128xf32, #tpu.memory_space<vmem>>) attributes {dimension_semantics = [#tpu.dimension_semantics<parallel>], iteration_bounds = array<i64: 1>, scalar_prefetch = 0 : i64, scratch_operands = 0 : i64, tpu.core_type = #tpu.core_type<tc>, window_params = [{transform_indices = @transform_0, window_bounds = array<i64: 8, 4>}, {pipeline_mode = #tpu.pipeline_mode<synchronous>, transform_indices = @transform_1, window_bounds = array<i64: 4, 128>}, {pipeline_mode = #tpu.pipeline_mode<synchronous>, transform_indices = @transform_2, window_bounds = array<i64: 1, 128>}, {transform_indices = @transform_3, window_bounds = array<i64: 8, 128>}]} {
    %c0 = arith.constant 0 : index
    %c0_0 = arith.constant 0 : index
    %0 = vector.load %arg1[%c0, %c0_0] : memref<8x4xf32, #tpu.memory_space<vmem>>, vector<8x4xf32>
    %c0_1 = arith.constant 0 : index
    %c0_2 = arith.constant 0 : index
    %1 = vector.load %arg2[%c0_1, %c0_2] : memref<4x128xf32, #tpu.memory_space<vmem>>, vector<4x128xf32>
    %c0_3 = arith.constant 0 : index
    %c0_4 = arith.constant 0 : index
    %2 = vector.load %arg3[%c0_3, %c0_4] : memref<1x128xf32, #tpu.memory_space<vmem>>, vector<1x128xf32>
    %3 = vector.shape_cast %2 : vector<1x128xf32> to vector<1x128xf32>
    %4 = vector.broadcast %3 : vector<1x128xf32> to vector<8x128xf32>
    %5 = vector.extract_strided_slice %0 {offsets = [0, 0], sizes = [8, 1], strides = [1, 1]} : vector<8x4xf32> to vector<8x1xf32>
    %6 = vector.extract_strided_slice %1 {offsets = [0, 0], sizes = [1, 128], strides = [1, 1]} : vector<4x128xf32> to vector<1x128xf32>
    %7 = vector.broadcast %5 : vector<8x1xf32> to vector<8x128xf32>
    %8 = vector.broadcast %6 : vector<1x128xf32> to vector<8x128xf32>
    %9 = arith.mulf %7, %8 : vector<8x128xf32>
    %10 = arith.addf %4, %9 : vector<8x128xf32>
    %11 = vector.extract_strided_slice %0 {offsets = [0, 1], sizes = [8, 1], strides = [1, 1]} : vector<8x4xf32> to vector<8x1xf32>
    %12 = vector.extract_strided_slice %1 {offsets = [1, 0], sizes = [1, 128], strides = [1, 1]} : vector<4x128xf32> to vector<1x128xf32>
    %13 = vector.broadcast %11 : vector<8x1xf32> to vector<8x128xf32>
    %14 = vector.broadcast %12 : vector<1x128xf32> to vector<8x128xf32>
    %15 = arith.mulf %13, %14 : vector<8x128xf32>
    %16 = arith.addf %10, %15 : vector<8x128xf32>
    %17 = vector.extract_strided_slice %0 {offsets = [0, 2], sizes = [8, 1], strides = [1, 1]} : vector<8x4xf32> to vector<8x1xf32>
    %18 = vector.extract_strided_slice %1 {offsets = [2, 0], sizes = [1, 128], strides = [1, 1]} : vector<4x128xf32> to vector<1x128xf32>
    %19 = vector.broadcast %17 : vector<8x1xf32> to vector<8x128xf32>
    %20 = vector.broadcast %18 : vector<1x128xf32> to vector<8x128xf32>
    %21 = arith.mulf %19, %20 : vector<8x128xf32>
    %22 = arith.addf %16, %21 : vector<8x128xf32>
    %23 = vector.extract_strided_slice %0 {offsets = [0, 3], sizes = [8, 1], strides = [1, 1]} : vector<8x4xf32> to vector<8x1xf32>
    %24 = vector.extract_strided_slice %1 {offsets = [3, 0], sizes = [1, 128], strides = [1, 1]} : vector<4x128xf32> to vector<1x128xf32>
    %25 = vector.broadcast %23 : vector<8x1xf32> to vector<8x128xf32>
    %26 = vector.broadcast %24 : vector<1x128xf32> to vector<8x128xf32>
    %27 = arith.mulf %25, %26 : vector<8x128xf32>
    %28 = arith.addf %22, %27 : vector<8x128xf32>
    %c0_5 = arith.constant 0 : index
    %c0_6 = arith.constant 0 : index
    %29 = vector.load %arg4[%c0_5, %c0_6] : memref<8x128xf32, #tpu.memory_space<vmem>>, vector<8x128xf32>
    tpu.vector_store %arg4[%c0_5, %c0_6], %28 {strides = array<i32>} : memref<8x128xf32, #tpu.memory_space<vmem>>, vector<8x128xf32>,
    return
  }
  func.func @transform_0(%arg0: i32) -> (i32, i32) {
    %c0_i32 = arith.constant 0 : i32
    %c0_i32_0 = arith.constant 0 : i32
    return %arg0, %c0_i32 : i32, i32
  }
  func.func @transform_1(%arg0: i32) -> (i32, i32) {
    %c0_i32 = arith.constant 0 : i32
    %c0_i32_0 = arith.constant 0 : i32
    %c0_i32_1 = arith.constant 0 : i32
    return %c0_i32, %c0_i32_0 : i32, i32
  }
  func.func @transform_2(%arg0: i32) -> (i32, i32) {
    %c0_i32 = arith.constant 0 : i32
    %c0_i32_0 = arith.constant 0 : i32
    %c0_i32_1 = arith.constant 0 : i32
    return %c0_i32, %c0_i32_0 : i32, i32
  }
  func.func @transform_3(%arg0: i32) -> (i32, i32) {
    %c0_i32 = arith.constant 0 : i32
    %c0_i32_0 = arith.constant 0 : i32
    return %arg0, %c0_i32 : i32, i32
  }
}

</mosaic_0001>

<llo_original>
// kernel: softmax_classifier_forward.1
$region0: #{softmax_classifier_forward.1}
  #allocation0 [shape = 'u32[]', space=smem, size = 0x4, offset = 0x4, fixed_abs, tag = 'smem constant byte address 0x4 - core index']
  #allocation1 [shape = 'u32[72,128]{1,0:T(1,128)}', space=vmem, size = 0x9000, scoped, tag = 'internal scratch']
  %s0 = inlined_call_operand.vmem [shape: f32[8,4], index: 0, kind: input, shape index: {}]
  %s1 = inlined_call_operand.vmem [shape: f32[4,128], index: 1, kind: input, shape index: {}]
  %s2 = inlined_call_operand.vmem [shape: f32[1,128], index: 2, kind: input, shape index: {}]
  %s3 = inlined_call_operand.vmem [shape: f32[8,128], index: 3, kind: output, shape index: {}]
  %s4 = sld [smem:[#allocation0]]
  $region22: #{softmax_classifier_forward.1} parent=0
    _
  %s6 = ssub.s32 1, %s4
  %s7 = scalar_select 0, %s6, %s4
  // Predicated region
  $region2: #{softmax_classifier_forward.1} parent=0 // pred_check
    _
  $region3: #{softmax_classifier_forward.1} parent=0 // pred_check_branch
    %9 = sbr.rel (0) target = $region5
  $region4: #{softmax_classifier_forward.1} parent=0 // pred_region
    _
  $region5: #{softmax_classifier_forward.1} parent=0 // pred_fallthru
    _
  // Predicated region
  $region6: #{softmax_classifier_forward.1} parent=0 // pred_check
    _
  $region7: #{softmax_classifier_forward.1} parent=0 // pred_check_branch
    %11 = sbr.rel (0) target = $region9
  $region8: #{softmax_classifier_forward.1} parent=0 // pred_region
    _
  $region9: #{softmax_classifier_forward.1} parent=0 // pred_fallthru
    _
  // Predicated region
  $region10: #{softmax_classifier_forward.1} parent=0 // pred_check
    _
  $region11: #{softmax_classifier_forward.1} parent=0 // pred_check_branch
    %13 = sbr.rel (0) target = $region13
  $region12: #{softmax_classifier_forward.1} parent=0 // pred_region
    _
  $region13: #{softmax_classifier_forward.1} parent=0 // pred_fallthru
    _
  %v14 = vld [vmem:[%s0] sm:$0xff]
  %v15 = vld [vmem:[%s1] sm:$0xf]
  %v16 = vld [vmem:[%s2] sm:$0x1]
  %v18 = vperm.slane %v16, 0
  %21 = vset.pattern.permute.xlu0 0
  %22 = vperm.xlu0 %21, %v14
  %v23 = vpop.permute.xlu0 %22
  %v25 = vperm.slane %v15, 0
  %v26 = vmul.f32 %v23, %v25
  %v27 = vadd.f32 %v18, %v26
  %28 = vset.pattern.permute.xlu0 1
  %29 = vperm.xlu0 %28, %v14
  %v30 = vpop.permute.xlu0 %29
  %v32 = vperm.slane %v15, 1
  %v33 = vmul.f32 %v30, %v32
  %v34 = vadd.f32 %v27, %v33
  %35 = vset.pattern.permute.xlu0 2
  %36 = vperm.xlu0 %35, %v14
  %v37 = vpop.permute.xlu0 %36
  %v39 = vperm.slane %v15, 2
  %v40 = vmul.f32 %v37, %v39
  %v41 = vadd.f32 %v34, %v40
  %42 = vset.pattern.permute.xlu0 3
  %43 = vperm.xlu0 %42, %v14
  %v44 = vpop.permute.xlu0 %43
  %v46 = vperm.slane %v15, 3
  %v47 = vmul.f32 %v44, %v46
  %v48 = vadd.f32 %v41, %v47
  %49 = vst [vmem:[%s3] sm:$0xff] %v48
  // Predicated region
  $region14: #{softmax_classifier_forward.1} parent=0 // pred_check
    _
  $region15: #{softmax_classifier_forward.1} parent=0 // pred_check_branch
    %51 = sbr.rel (0) target = $region17
  $region16: #{softmax_classifier_forward.1} parent=0 // pred_region
    _
  $region17: #{softmax_classifier_forward.1} parent=0 // pred_fallthru
    _
  // Predicated region
  $region18: #{softmax_classifier_forward.1} parent=0 // pred_check
    _
  $region19: #{softmax_classifier_forward.1} parent=0 // pred_check_branch
    %53 = sbr.rel (0) target = $region21
  $region20: #{softmax_classifier_forward.1} parent=0 // pred_region
    _
  $region21: #{softmax_classifier_forward.1} parent=0 // pred_fallthru
    _

</llo_original>
